<compile_context>
chip_gen: v7x
topology: tpu7x:2x2x1
jax: 0.10.0
libtpu: 0.0.40
codegen_flags: <defaults>
</compile_context>

<pallas_src>
import functools

import jax
import jax.numpy as jnp
from jax import lax
from jax.experimental import pallas as pl
from jax.experimental.pallas import tpu as pltpu

_LANE = 128
_EPS = 1e-5


def _round_up(n, m):
    return ((n + m - 1) // m) * m


def _vmem_spec():
    return pl.BlockSpec(memory_space=pltpu.MemorySpace.VMEM)


def _make_compiler_params():
    # Keep the scoped VMEM limit well under physical capacity on every chip
    # generation (v7x has only 64 MiB per TensorCore).  The fused MLP itself
    # needs only a few hundred KiB at small batch.
    try:
        cap = pltpu.get_tpu_info().vmem_capacity_bytes
    except Exception:  # conservative fallback if the query is unavailable
        cap = 64 * 1024 * 1024
    return pltpu.CompilerParams(vmem_limit_bytes=min(48 * 1024 * 1024, (cap * 3) // 4))


_COMPILER_PARAMS = _make_compiler_params()


# ----------------------------------------------------------------------------
# Fused kernel: the whole DomainDiscriminator forward pass
# ----------------------------------------------------------------------------
def _domain_disc_kernel(x_ref, w_ref, vec_ref, o_ref, *, f_in):
    """relu(bn1(x@W1+b1)) -> relu(bn2(.@W2+b2)) -> sigmoid(.@W3+b3), fused.

    x_ref  : (B, f_in)            f32   (natural, un-padded)
    w_ref  : (3, dim_p, dim_p)    bf16  (stacked, zero-padded, pre-transposed)
    vec_ref: (8, dim_p)           f32   rows = b1,g1,be1,b2,g2,be2,b3,0
    o_ref  : (B, 128)             f32   lane-dense output slab (col 0 is real)
    """
    vecs = vec_ref[...]                                   # one small DMA'd block
    b1, g1, be1 = vecs[0:1, :], vecs[1:2, :], vecs[2:3, :]
    b2, g2, be2 = vecs[3:4, :], vecs[4:5, :], vecs[5:6, :]
    b3 = vecs[6:7, :_LANE]

    x = x_ref[...].astype(jnp.bfloat16)                   # bf16 only at MXU boundary

    def bn_relu(h, g, beta):
        # BatchNorm1d with batch statistics (training mode), biased variance.
        # Padded columns stay exactly 0 (zero weight/bias/gamma/beta pads).
        mean = jnp.mean(h, axis=0, keepdims=True)
        var = jnp.mean(jnp.square(h - mean), axis=0, keepdims=True)
        h = (h - mean) * lax.rsqrt(var + _EPS) * g + beta
        return jnp.maximum(h, 0.0)                        # ReLU

    # Layer 1: only the first f_in rows of the padded W1 are real.
    w1 = w_ref[0][:f_in, :]
    h1 = jnp.dot(x, w1, preferred_element_type=jnp.float32) + b1
    h1 = bn_relu(h1, g1, be1)

    # Layer 2
    h2 = jnp.dot(h1.astype(jnp.bfloat16), w_ref[1],
                 preferred_element_type=jnp.float32) + b2
    h2 = bn_relu(h2, g2, be2)

    # Layer 3 + sigmoid (exp on EUP, approx reciprocal on EUP -> no VPU divide)
    w3 = w_ref[2][:, :_LANE]
    z = jnp.dot(h2.astype(jnp.bfloat16), w3,
                preferred_element_type=jnp.float32) + b3
    o_ref[...] = pl.reciprocal(1.0 + jnp.exp(-z), approx=True)


# ----------------------------------------------------------------------------
# Wrapper
# ----------------------------------------------------------------------------
def domain_discriminator_forward(x, params):
    """x: (minibatch, in_feature) f32  ->  (minibatch, 1) f32 in [0, 1]."""
    B, f_in = x.shape
    w_all = params["w_all"]   # (3, dim_p, dim_p) bf16
    vecs = params["vecs"]     # (8, dim_p) f32

    kernel = functools.partial(_domain_disc_kernel, f_in=f_in)
    out_p = pl.pallas_call(
        kernel,
        out_shape=jax.ShapeDtypeStruct((B, _LANE), jnp.float32),  # lane-dense slab
        in_specs=[_vmem_spec()] * 3,   # x, stacked weights, packed vectors
        out_specs=_vmem_spec(),
        compiler_params=_COMPILER_PARAMS,
    )(x.astype(jnp.float32), w_all, vecs)
    return out_p[:, :1]               # slice the single real output column


# ----------------------------------------------------------------------------
# Deterministic parameter construction (torch layout -> packed TPU layout)
# ----------------------------------------------------------------------------
def init_params(key, in_feature, hidden_size, scale=0.05):
    dim_p = max(_round_up(in_feature, _LANE), _round_up(hidden_size, _LANE), _LANE)

    k = jax.random.split(key, 10)
    # torch nn.Linear weights are stored as (out_features, in_features)
    w1_t = jax.random.normal(k[0], (hidden_size, in_feature), jnp.float32) * scale
    b1 = jax.random.normal(k[1], (hidden_size,), jnp.float32) * scale
    w2_t = jax.random.normal(k[2], (hidden_size, hidden_size), jnp.float32) * scale
    b2 = jax.random.normal(k[3], (hidden_size,), jnp.float32) * scale
    w3_t = jax.random.normal(k[4], (1, hidden_size), jnp.float32) * scale
    b3 = jax.random.normal(k[5], (1,), jnp.float32) * scale
    g1 = 1.0 + jax.random.normal(k[6], (hidden_size,), jnp.float32) * 0.05
    be1 = jax.random.normal(k[7], (hidden_size,), jnp.float32) * 0.05
    g2 = 1.0 + jax.random.normal(k[8], (hidden_size,), jnp.float32) * 0.05
    be2 = jax.random.normal(k[9], (hidden_size,), jnp.float32) * 0.05

    def pad_w(w_t):
        # (out, in) -> (in, out), zero-pad to (dim_p, dim_p).
        # Zero pads keep padded columns exactly 0 through BN + ReLU.
        w = jnp.transpose(w_t)
        return jnp.pad(w, ((0, dim_p - w.shape[0]), (0, dim_p - w.shape[1])))

    def pad_v(v):
        return jnp.pad(v, (0, dim_p - v.shape[0]))

    # One stacked bf16 weight DMA and one packed f32 vector DMA.
    w_all = jnp.stack([pad_w(w1_t), pad_w(w2_t), pad_w(w3_t)]).astype(jnp.bfloat16)
    vecs = jnp.stack([pad_v(b1), pad_v(g1), pad_v(be1),
                      pad_v(b2), pad_v(g2), pad_v(be2),
                      pad_v(b3), jnp.zeros((dim_p,), jnp.float32)])

    packed = dict(w_all=w_all, vecs=vecs)
    raw = dict(w1_t=w1_t, b1=b1, g1=g1, be1=be1,
               w2_t=w2_t, b2=b2, g2=g2, be2=be2,
               w3_t=w3_t, b3=b3)
    return packed, raw


# ----------------------------------------------------------------------------
# Pure-JAX reference (f32) for a correctness check
# ----------------------------------------------------------------------------
def _reference_forward(x, raw):
    def bn(h, g, b):
        m = jnp.mean(h, axis=0, keepdims=True)
        v = jnp.mean(jnp.square(h - m), axis=0, keepdims=True)
        return (h - m) * lax.rsqrt(v + _EPS) * g + b

    h = jnp.maximum(bn(x @ raw["w1_t"].T + raw["b1"], raw["g1"], raw["be1"]), 0.0)
    h = jnp.maximum(bn(h @ raw["w2_t"].T + raw["b2"], raw["g2"], raw["be2"]), 0.0)
    z = h @ raw["w3_t"].T + raw["b3"]
    return 1.0 / (1.0 + jnp.exp(-z))


# ----------------------------------------------------------------------------
if __name__ == "__main__":
    batch, in_feature, hidden_size = 8, 64, 32

    root = jax.random.PRNGKey(0)
    k_x, k_p = jax.random.split(root)
    x = jax.random.normal(k_x, (batch, in_feature), jnp.float32)
    params, raw = init_params(k_p, in_feature, hidden_size)

    fwd = jax.jit(domain_discriminator_forward)
    y = fwd(x, params)
    jax.block_until_ready(y)
    assert y.shape == (batch, 1), y.shape

    y_ref = _reference_forward(x, raw)
    # bf16 weights / MXU inputs + approx reciprocal => loosened tolerance
    # (deliberate deviation from the f32 torch module; use f32 matmuls if exact
    # parity is ever required -- the problem is far too small for it to matter).
    err = float(jnp.max(jnp.abs(y - y_ref)))
    assert err < 3e-2, f"max abs error vs f32 reference: {err}"

    print("KERNEL_OK")
</pallas_src>

<mosaic_0001>
module attributes {stable_mosaic.version = 11 : i64} {
  func.func @_domain_disc_kernel(%arg0: memref<8x64xf32, #tpu.memory_space<vmem>>, %arg1: memref<3x128x128xbf16, #tpu.memory_space<vmem>>, %arg2: memref<8x128xf32, #tpu.memory_space<vmem>>, %arg3: memref<8x128xf32, #tpu.memory_space<vmem>>) attributes {dimension_semantics = [], scalar_prefetch = 0 : i64, scratch_operands = 0 : i64, tpu.core_type = #tpu.core_type<tc>} {
    %c0 = arith.constant 0 : index
    %c0_0 = arith.constant 0 : index
    %0 = vector.load %arg2[%c0, %c0_0] : memref<8x128xf32, #tpu.memory_space<vmem>>, vector<8x128xf32>
    %1 = vector.extract_strided_slice %0 {offsets = [0, 0], sizes = [1, 128], strides = [1, 1]} : vector<8x128xf32> to vector<1x128xf32>
    %2 = vector.extract_strided_slice %0 {offsets = [1, 0], sizes = [1, 128], strides = [1, 1]} : vector<8x128xf32> to vector<1x128xf32>
    %3 = vector.extract_strided_slice %0 {offsets = [2, 0], sizes = [1, 128], strides = [1, 1]} : vector<8x128xf32> to vector<1x128xf32>
    %4 = vector.extract_strided_slice %0 {offsets = [3, 0], sizes = [1, 128], strides = [1, 1]} : vector<8x128xf32> to vector<1x128xf32>
    %5 = vector.extract_strided_slice %0 {offsets = [4, 0], sizes = [1, 128], strides = [1, 1]} : vector<8x128xf32> to vector<1x128xf32>
    %6 = vector.extract_strided_slice %0 {offsets = [5, 0], sizes = [1, 128], strides = [1, 1]} : vector<8x128xf32> to vector<1x128xf32>
    %7 = vector.extract_strided_slice %0 {offsets = [6, 0], sizes = [1, 128], strides = [1, 1]} : vector<8x128xf32> to vector<1x128xf32>
    %c0_1 = arith.constant 0 : index
    %c0_2 = arith.constant 0 : index
    %8 = vector.load %arg0[%c0_1, %c0_2] : memref<8x64xf32, #tpu.memory_space<vmem>>, vector<8x64xf32>
    %9 = arith.truncf %8 : vector<8x64xf32> to vector<8x64xbf16>
    %c0_3 = arith.constant 0 : index
    %c0_4 = arith.constant 0 : index
    %c0_5 = arith.constant 0 : index
    %10 = vector.load %arg1[%c0_3, %c0_4, %c0_5] : memref<3x128x128xbf16, #tpu.memory_space<vmem>>, vector<1x128x128xbf16>
    %11 = vector.shape_cast %10 : vector<1x128x128xbf16> to vector<128x128xbf16>
    %12 = vector.extract_strided_slice %11 {offsets = [0, 0], sizes = [64, 128], strides = [1, 1]} : vector<128x128xbf16> to vector<64x128xbf16>
    %cst = arith.constant dense<0.000000e+00> : vector<8x128xf32>
    %13 = tpu.matmul %9, %12, %cst {dimension_numbers = #tpu.dot_dimension_numbers<[1], [0], [0], [1], [0, 0, 1, 1], [], []>} : vector<8x64xbf16>, vector<64x128xbf16>, vector<8x128xf32> -> vector<8x128xf32>
    %14 = vector.broadcast %1 : vector<1x128xf32> to vector<8x128xf32>
    %15 = arith.addf %13, %14 : vector<8x128xf32>
    %cst_6 = arith.constant dense<0.000000e+00> : vector<128xf32>
    %16 = vector.multi_reduction <add>, %15, %cst_6 [0] : vector<8x128xf32> to vector<128xf32>
    %17 = vector.shape_cast %16 : vector<128xf32> to vector<1x128xf32>
    %cst_7 = arith.constant 8.000000e+00 : f32
    %18 = vector.broadcast %cst_7 : f32 to vector<1x128xf32>
    %19 = arith.divf %17, %18 : vector<1x128xf32>
    %20 = vector.broadcast %19 : vector<1x128xf32> to vector<8x128xf32>
    %21 = arith.subf %15, %20 : vector<8x128xf32>
    %22 = arith.mulf %21, %21 : vector<8x128xf32>
    %cst_8 = arith.constant dense<0.000000e+00> : vector<128xf32>
    %23 = vector.multi_reduction <add>, %22, %cst_8 [0] : vector<8x128xf32> to vector<128xf32>
    %24 = vector.shape_cast %23 : vector<128xf32> to vector<1x128xf32>
    %cst_9 = arith.constant 8.000000e+00 : f32
    %25 = vector.broadcast %cst_9 : f32 to vector<1x128xf32>
    %26 = arith.divf %24, %25 : vector<1x128xf32>
    %27 = vector.broadcast %19 : vector<1x128xf32> to vector<8x128xf32>
    %28 = arith.subf %15, %27 : vector<8x128xf32>
    %cst_10 = arith.constant 9.99999974E-6 : f32
    %29 = vector.broadcast %cst_10 : f32 to vector<1x128xf32>
    %30 = arith.addf %26, %29 : vector<1x128xf32>
    %31 = math.rsqrt %30 : vector<1x128xf32>
    %32 = vector.broadcast %31 : vector<1x128xf32> to vector<8x128xf32>
    %33 = arith.mulf %28, %32 : vector<8x128xf32>
    %34 = vector.broadcast %2 : vector<1x128xf32> to vector<8x128xf32>
    %35 = arith.mulf %33, %34 : vector<8x128xf32>
    %36 = vector.broadcast %3 : vector<1x128xf32> to vector<8x128xf32>
    %37 = arith.addf %35, %36 : vector<8x128xf32>
    %cst_11 = arith.constant 0.000000e+00 : f32
    %38 = vector.broadcast %cst_11 : f32 to vector<8x128xf32>
    %39 = arith.maximumf %37, %38 : vector<8x128xf32>
    %40 = arith.truncf %39 : vector<8x128xf32> to vector<8x128xbf16>
    %c1 = arith.constant 1 : index
    %c0_12 = arith.constant 0 : index
    %c0_13 = arith.constant 0 : index
    %41 = vector.load %arg1[%c1, %c0_12, %c0_13] : memref<3x128x128xbf16, #tpu.memory_space<vmem>>, vector<1x128x128xbf16>
    %42 = vector.shape_cast %41 : vector<1x128x128xbf16> to vector<128x128xbf16>
    %cst_14 = arith.constant dense<0.000000e+00> : vector<8x128xf32>
    %43 = tpu.matmul %40, %42, %cst_14 {dimension_numbers = #tpu.dot_dimension_numbers<[1], [0], [0], [1], [0, 0, 1, 1], [], []>} : vector<8x128xbf16>, vector<128x128xbf16>, vector<8x128xf32> -> vector<8x128xf32>
    %44 = vector.broadcast %4 : vector<1x128xf32> to vector<8x128xf32>
    %45 = arith.addf %43, %44 : vector<8x128xf32>
    %cst_15 = arith.constant dense<0.000000e+00> : vector<128xf32>
    %46 = vector.multi_reduction <add>, %45, %cst_15 [0] : vector<8x128xf32> to vector<128xf32>
    %47 = vector.shape_cast %46 : vector<128xf32> to vector<1x128xf32>
    %cst_16 = arith.constant 8.000000e+00 : f32
    %48 = vector.broadcast %cst_16 : f32 to vector<1x128xf32>
    %49 = arith.divf %47, %48 : vector<1x128xf32>
    %50 = vector.broadcast %49 : vector<1x128xf32> to vector<8x128xf32>
    %51 = arith.subf %45, %50 : vector<8x128xf32>
    %52 = arith.mulf %51, %51 : vector<8x128xf32>
    %cst_17 = arith.constant dense<0.000000e+00> : vector<128xf32>
    %53 = vector.multi_reduction <add>, %52, %cst_17 [0] : vector<8x128xf32> to vector<128xf32>
    %54 = vector.shape_cast %53 : vector<128xf32> to vector<1x128xf32>
    %cst_18 = arith.constant 8.000000e+00 : f32
    %55 = vector.broadcast %cst_18 : f32 to vector<1x128xf32>
    %56 = arith.divf %54, %55 : vector<1x128xf32>
    %57 = vector.broadcast %49 : vector<1x128xf32> to vector<8x128xf32>
    %58 = arith.subf %45, %57 : vector<8x128xf32>
    %cst_19 = arith.constant 9.99999974E-6 : f32
    %59 = vector.broadcast %cst_19 : f32 to vector<1x128xf32>
    %60 = arith.addf %56, %59 : vector<1x128xf32>
    %61 = math.rsqrt %60 : vector<1x128xf32>
    %62 = vector.broadcast %61 : vector<1x128xf32> to vector<8x128xf32>
    %63 = arith.mulf %58, %62 : vector<8x128xf32>
    %64 = vector.broadcast %5 : vector<1x128xf32> to vector<8x128xf32>
    %65 = arith.mulf %63, %64 : vector<8x128xf32>
    %66 = vector.broadcast %6 : vector<1x128xf32> to vector<8x128xf32>
    %67 = arith.addf %65, %66 : vector<8x128xf32>
    %cst_20 = arith.constant 0.000000e+00 : f32
    %68 = vector.broadcast %cst_20 : f32 to vector<8x128xf32>
    %69 = arith.maximumf %67, %68 : vector<8x128xf32>
    %c2 = arith.constant 2 : index
    %c0_21 = arith.constant 0 : index
    %c0_22 = arith.constant 0 : index
    %70 = vector.load %arg1[%c2, %c0_21, %c0_22] : memref<3x128x128xbf16, #tpu.memory_space<vmem>>, vector<1x128x128xbf16>
    %71 = vector.shape_cast %70 : vector<1x128x128xbf16> to vector<128x128xbf16>
    %72 = arith.truncf %69 : vector<8x128xf32> to vector<8x128xbf16>
    %cst_23 = arith.constant dense<0.000000e+00> : vector<8x128xf32>
    %73 = tpu.matmul %72, %71, %cst_23 {dimension_numbers = #tpu.dot_dimension_numbers<[1], [0], [0], [1], [0, 0, 1, 1], [], []>} : vector<8x128xbf16>, vector<128x128xbf16>, vector<8x128xf32> -> vector<8x128xf32>
    %74 = vector.broadcast %7 : vector<1x128xf32> to vector<8x128xf32>
    %75 = arith.addf %73, %74 : vector<8x128xf32>
    %cst_24 = arith.constant 0.000000e+00 : f32
    %76 = vector.broadcast %cst_24 : f32 to vector<8x128xf32>
    %77 = arith.subf %76, %75 : vector<8x128xf32>
    %78 = math.exp %77 : vector<8x128xf32>
    %cst_25 = arith.constant 1.000000e+00 : f32
    %79 = vector.broadcast %cst_25 : f32 to vector<8x128xf32>
    %80 = arith.addf %79, %78 : vector<8x128xf32>
    %81 = tpu.reciprocal %80 {approx = true} : vector<8x128xf32> -> vector<8x128xf32>
    %c0_26 = arith.constant 0 : index
    %c0_27 = arith.constant 0 : index
    %82 = vector.load %arg3[%c0_26, %c0_27] : memref<8x128xf32, #tpu.memory_space<vmem>>, vector<8x128xf32>
    tpu.vector_store %arg3[%c0_26, %c0_27], %81 {strides = array<i32>} : memref<8x128xf32, #tpu.memory_space<vmem>>, vector<8x128xf32>,
    return
  }
}

</mosaic_0001>

<llo_original>
// kernel: domain_discriminator_forward.1
$region0: #{domain_discriminator_forward.1}
  #allocation0 [shape = 'u32[]', space=smem, size = 0x4, offset = 0x4, fixed_abs, tag = 'smem constant byte address 0x4 - core index']
  #allocation1 [shape = 'u32[144,128]{1,0:T(1,128)}', space=vmem, size = 0x12000, scoped, tag = 'internal scratch']
  %s0 = inlined_call_operand.hbm [shape: f32[8,64], index: 0, kind: input, shape index: {}]
  %s1 = inlined_call_operand.hbm [shape: bf16[3,128,128], index: 1, kind: input, shape index: {}]
  %s2 = inlined_call_operand.hbm [shape: f32[8,128], index: 2, kind: input, shape index: {}]
  %s3 = inlined_call_operand.vmem [shape: f32[8,128], index: 3, kind: output, shape index: {}]
  %s4 = sld [smem:[#allocation0]]
  $region34: #{domain_discriminator_forward.1} parent=0
    _
  %s6 = ssub.s32 1, %s4
  %s7 = scalar_select 0, %s6, %s4
  $region1: #{domain_discriminator_forward.1} parent=0
    #allocation2 [shape = 'u8[4096]{0}', space=vmem, size = 0x1000, scoped, tag = 'input window, operand 0, single buffered']
    #allocation3 [shape = 's32[1]{0}', space=sflag, size = 0x4, scoped, tag = 'scoped memory for domain_discriminator_forward.1']
    #allocation4 [shape = 'u8[98304]{0}', space=vmem, size = 0x18000, scoped, tag = 'input window, operand 1, single buffered']
    #allocation5 [shape = 's32[1]{0}', space=sflag, size = 0x4, scoped, tag = 'scoped memory for domain_discriminator_forward.1']
    #allocation6 [shape = 'u8[4096]{0}', space=vmem, size = 0x1000, scoped, tag = 'input window, operand 2, single buffered']
    %8 = vsyncpa [#allocation3], 0
    %9 = vsyncpa [#allocation5], 0
    // Predicated region
    $region2: #{domain_discriminator_forward.1} parent=1 // pred_check
      _
    $region3: #{domain_discriminator_forward.1} parent=1 // pred_check_branch
      %11 = sbr.rel (0) target = $region5
    $region4: #{domain_discriminator_forward.1} parent=1 // pred_region
      %s13 = ssub.s32 128, 128
      %14 = vsyncadd [#allocation3], %s13
      %s16 = sshll.u32 [#allocation2], 4
      %s17 = int_to_ptr.vmem [resolvable:$true] %s16
      %19 = dma.hbm_to_vmem [thread:$0]  %s0, 128, %s17, [#allocation3]
    $region5: #{domain_discriminator_forward.1} parent=1 // pred_fallthru
      _
    // Predicated region
    $region6: #{domain_discriminator_forward.1} parent=1 // pred_check
      _
    $region7: #{domain_discriminator_forward.1} parent=1 // pred_check_branch
      %21 = sbr.rel (0) target = $region9
    $region8: #{domain_discriminator_forward.1} parent=1 // pred_region
      %s23 = ssub.s32 3072, 3072
      %24 = vsyncadd [#allocation5], %s23
      %s25 = sshll.u32 [#allocation4], 4
      %s26 = int_to_ptr.vmem [resolvable:$true] %s25
      %31 = dma.hbm_to_vmem [thread:$0]  %s1, 3072, %s26, [#allocation5], 64, 64, 4
    $region9: #{domain_discriminator_forward.1} parent=1 // pred_fallthru
      _
    // Predicated region
    $region10: #{domain_discriminator_forward.1} parent=1 // pred_check
      _
    $region11: #{domain_discriminator_forward.1} parent=1 // pred_check_branch
      %33 = sbr.rel (0) target = $region13
    $region12: #{domain_discriminator_forward.1} parent=1 // pred_region
      %s35 = ssub.s32 128, 128
      %36 = vsyncadd [#allocation5], %s35
      %s38 = sshll.u32 [#allocation6], 4
      %s39 = int_to_ptr.vmem [resolvable:$true] %s38
      %41 = dma.hbm_to_vmem [thread:$0]  %s2, 128, %s39, [#allocation5]
    $region13: #{domain_discriminator_forward.1} parent=1 // pred_fallthru
      _
    // Predicated region
    $region14: #{domain_discriminator_forward.1} parent=1 // pred_check
      _
    $region15: #{domain_discriminator_forward.1} parent=1 // pred_check_branch
      %43 = sbr.rel (0) target = $region17
    $region16: #{domain_discriminator_forward.1} parent=1 // pred_region
      %44 = dma.done [#allocation3], 128
    $region17: #{domain_discriminator_forward.1} parent=1 // pred_fallthru
      _
    // Predicated region
    $region18: #{domain_discriminator_forward.1} parent=1 // pred_check
      _
    $region19: #{domain_discriminator_forward.1} parent=1 // pred_check_branch
      %46 = sbr.rel (0) target = $region21
    $region20: #{domain_discriminator_forward.1} parent=1 // pred_region
      %47 = dma.done [#allocation5], 3072
    $region21: #{domain_discriminator_forward.1} parent=1 // pred_fallthru
      _
    // Predicated region
    $region22: #{domain_discriminator_forward.1} parent=1 // pred_check
      _
    $region23: #{domain_discriminator_forward.1} parent=1 // pred_check_branch
      %49 = sbr.rel (0) target = $region25
    $region24: #{domain_discriminator_forward.1} parent=1 // pred_region
      %50 = dma.done [#allocation5], 128
    $region25: #{domain_discriminator_forward.1} parent=1 // pred_fallthru
      _
    %v52 = vld [vmem:[#allocation6] sm:$0xff]
    %v53 = vld [vmem:[#allocation2] sm:$0xff]
    %v54 = vpack.c.bf16 %v53, %v53
    %v55 = vld [vmem:[#allocation4] sm:$0xf]
    %v56 = vld [vmem:[#allocation4 + $0x4] sm:$0xf]
    %v57 = vld [vmem:[#allocation4 + $0x8] sm:$0xf]
    %v58 = vld [vmem:[#allocation4 + $0xc] sm:$0xf]
    %v59 = vld [vmem:[#allocation4 + $0x10] sm:$0xf]
    %v60 = vld [vmem:[#allocation4 + $0x14] sm:$0xf]
    %v61 = vld [vmem:[#allocation4 + $0x18] sm:$0xf]
    %v62 = vld [vmem:[#allocation4 + $0x1c] sm:$0xf]
    %v63 = vlaneseq
    %v64 = vshrl.u32 %v63, 7
    %v65 = vsub.s32 0, %v64
    %v66 = vrot.slane %v52, %v65
    %v75 = vunpack.c.l.b16 %v55
    %v76 = vunpack.c.l.b16 %v56
    %v77 = vunpack.c.l.b16 %v57
    %v78 = vunpack.c.l.b16 %v58
    %v79 = vunpack.c.l.b16 %v59
    %v80 = vunpack.c.l.b16 %v60
    %v81 = vunpack.c.l.b16 %v61
    %v82 = vunpack.c.l.b16 %v62
    %v83 = vpack.c.b16 %v76, %v75
    %v84 = vpack.c.b16 %v78, %v77
    %v85 = vpack.c.b16 %v80, %v79
    %v86 = vpack.c.b16 %v82, %v81
    %vm91 = vcmask 523264
    %v93 = vsel %vm91, %v54, 0
    %95 = vmatprep.subr.bf16.mxu0 0
    %96 = vmatpush1.bf16.msra.mxu0 %v83
    %97 = vmatprep.subr.bf16.mxu0 0
    %98 = vmatpush1.bf16.msra.mxu0 %v84
    %99 = vmatprep.subr.bf16.mxu0 0
    %100 = vmatpush1.bf16.msra.mxu0 %v85
    %101 = vmatprep.subr.bf16.mxu0 0
    %102 = vmatpush1.bf16.msra.mxu0 %v86
    %103 = vmatprep.subr.bf16.mxu0 0
    %104 = vmatpush1.bf16.msra.mxu0 0
    %105 = vmatprep.subr.bf16.mxu0 0
    %106 = vmatpush1.bf16.msra.mxu0 0
    %107 = vmatprep.subr.bf16.mxu0 0
    %108 = vmatpush1.bf16.msra.mxu0 0
    %109 = vmatprep.subr.bf16.mxu0 0
    %110 = vmatpush1.bf16.msra.mxu0 0
    %111 = vmatprep.subr.bf16.mxu0 0
    %112 = vmatpush1.bf16.msra.mxu0 0
    %113 = vmatprep.subr.bf16.mxu0 0
    %114 = vmatpush1.bf16.msra.mxu0 0
    %115 = vmatprep.subr.bf16.mxu0 0
    %116 = vmatpush1.bf16.msra.mxu0 0
    %117 = vmatprep.subr.bf16.mxu0 0
    %118 = vmatpush1.bf16.msra.mxu0 0
    %119 = vmatprep.subr.bf16.mxu0 0
    %120 = vmatpush1.bf16.msra.mxu0 0
    %121 = vmatprep.subr.bf16.mxu0 0
    %122 = vmatpush1.bf16.msra.mxu0 0
    %123 = vmatprep.subr.bf16.mxu0 0
    %124 = vmatpush1.bf16.msra.mxu0 0
    %125 = vmatprep.subr.bf16.mxu0 0
    %126 = vmatpush1.bf16.msra.mxu0 0
    %127 = vmatprep.mubr.bf16.mxu0 0
    %128 = vmatmul.mubr.bf16.gmra.mrb[0].mxu0 %v93
    %v129 = vpop.f32.mrb[0].mxu0
    %v130 = vadd.f32 %v66, %v129
    %v131 = vpop.f32.mrb[0].mxu0
    %v132 = vpop.f32.mrb[0].mxu0
    %v133 = vpop.f32.mrb[0].mxu0
    %134 = vdwg.mxu0
    %v135 = vrot.slane %v130, 4
    %v136 = vadd.f32 %v130, %v135
    %v137 = vrot.slane %v136, 2
    %v138 = vadd.f32 %v136, %v137
    %v139 = vrot.slane %v138, 1
    %v140 = vadd.f32 %v138, %v139
    %v141 = vrcp.pop 8.0
    %v142 = vmul.f32 %v140, %v141
    %v143 = vsub.f32 %v130, %v142
    %v144 = vmul.f32 %v143, %v143
    %v145 = vrot.slane %v144, 4
    %v146 = vadd.f32 %v144, %v145
    %v147 = vrot.slane %v146, 2
    %v148 = vadd.f32 %v146, %v147
    %v149 = vrot.slane %v148, 1
    %v150 = vadd.f32 %v148, %v149
    %v151 = vmul.f32 %v150, %v141
    %v152 = vadd.f32 %v151, 1e-05
    %v153 = vrsqrt.pop %v152
    %v154 = vmul.f32 %v143, %v153
    %v155 = vlaneseq
    %v156 = vshrl.u32 %v155, 7
    %v157 = vsub.s32 1, %v156
    %v158 = vrot.slane %v52, %v157
    %v159 = vmul.f32 %v154, %v158
    %v160 = vlaneseq
    %v161 = vshrl.u32 %v160, 7
    %v162 = vsub.s32 2, %v161
    %v163 = vrot.slane %v52, %v162
    %v164 = vadd.f32 %v159, %v163
    %v165 = vmax.f32 %v164, 0.0
    %v166 = vpack.c.bf16 %v165, %v165
    %s167 = scalar_lea.vmem [#allocation4], 64
    %v168 = vld [vmem:[%s167] sm:$0xf]
    %v169 = vld [vmem:[%s167 + $0x4] sm:$0xf]
    %v170 = vld [vmem:[%s167 + $0x8] sm:$0xf]
    %v171 = vld [vmem:[%s167 + $0xc] sm:$0xf]
    %v172 = vld [vmem:[%s167 + $0x10] sm:$0xf]
    %v173 = vld [vmem:[%s167 + $0x14] sm:$0xf]
    %v174 = vld [vmem:[%s167 + $0x18] sm:$0xf]
    %v175 = vld [vmem:[%s167 + $0x1c] sm:$0xf]
    %v176 = vld [vmem:[%s167 + $0x20] sm:$0xf]
    %v177 = vld [vmem:[%s167 + $0x24] sm:$0xf]
    %v178 = vld [vmem:[%s167 + $0x28] sm:$0xf]
    %v179 = vld [vmem:[%s167 + $0x2c] sm:$0xf]
    %v180 = vld [vmem:[%s167 + $0x30] sm:$0xf]
    %v181 = vld [vmem:[%s167 + $0x34] sm:$0xf]
    %v182 = vld [vmem:[%s167 + $0x38] sm:$0xf]
    %v183 = vld [vmem:[%s167 + $0x3c] sm:$0xf]
    %v184 = vlaneseq
    %v185 = vshrl.u32 %v184, 7
    %v186 = vsub.s32 3, %v185
    %v187 = vrot.slane %v52, %v186
    %v204 = vunpack.c.l.b16 %v168
    %v205 = vunpack.c.l.b16 %v169
    %v206 = vunpack.c.l.b16 %v170
    %v207 = vunpack.c.l.b16 %v171
    %v208 = vunpack.c.l.b16 %v172
    %v209 = vunpack.c.l.b16 %v173
    %v210 = vunpack.c.l.b16 %v174
    %v211 = vunpack.c.l.b16 %v175
    %v212 = vunpack.c.l.b16 %v176
    %v213 = vunpack.c.l.b16 %v177
    %v214 = vunpack.c.l.b16 %v178
    %v215 = vunpack.c.l.b16 %v179
    %v216 = vunpack.c.l.b16 %v180
    %v217 = vunpack.c.l.b16 %v181
    %v218 = vunpack.c.l.b16 %v182
    %v219 = vunpack.c.l.b16 %v183
    %v220 = vpack.c.b16 %v205, %v204
    %v221 = vpack.c.b16 %v207, %v206
    %v222 = vpack.c.b16 %v209, %v208
    %v223 = vpack.c.b16 %v211, %v210
    %v224 = vpack.c.b16 %v213, %v212
    %v225 = vpack.c.b16 %v215, %v214
    %v226 = vpack.c.b16 %v217, %v216
    %v227 = vpack.c.b16 %v219, %v218
    %236 = vmatprep.subr.bf16.mxu0 0
    %237 = vmatpush1.bf16.msra.mxu0 %v220
    %238 = vmatprep.subr.bf16.mxu0 0
    %239 = vmatpush1.bf16.msra.mxu0 %v221
    %240 = vmatprep.subr.bf16.mxu0 0
    %241 = vmatpush1.bf16.msra.mxu0 %v222
    %242 = vmatprep.subr.bf16.mxu0 0
    %243 = vmatpush1.bf16.msra.mxu0 %v223
    %244 = vmatprep.subr.bf16.mxu0 0
    %245 = vmatpush1.bf16.msra.mxu0 %v224
    %246 = vmatprep.subr.bf16.mxu0 0
    %247 = vmatpush1.bf16.msra.mxu0 %v225
    %248 = vmatprep.subr.bf16.mxu0 0
    %249 = vmatpush1.bf16.msra.mxu0 %v226
    %250 = vmatprep.subr.bf16.mxu0 0
    %251 = vmatpush1.bf16.msra.mxu0 %v227
    %252 = vmatprep.subr.bf16.mxu0 0
    %253 = vmatpush1.bf16.msra.mxu0 0
    %254 = vmatprep.subr.bf16.mxu0 0
    %255 = vmatpush1.bf16.msra.mxu0 0
    %256 = vmatprep.subr.bf16.mxu0 0
    %257 = vmatpush1.bf16.msra.mxu0 0
    %258 = vmatprep.subr.bf16.mxu0 0
    %259 = vmatpush1.bf16.msra.mxu0 0
    %260 = vmatprep.subr.bf16.mxu0 0
    %261 = vmatpush1.bf16.msra.mxu0 0
    %262 = vmatprep.subr.bf16.mxu0 0
    %263 = vmatpush1.bf16.msra.mxu0 0
    %264 = vmatprep.subr.bf16.mxu0 0
    %265 = vmatpush1.bf16.msra.mxu0 0
    %266 = vmatprep.subr.bf16.mxu0 0
    %267 = vmatpush1.bf16.msra.mxu0 0
    %268 = vmatprep.mubr.bf16.mxu0 0
    %269 = vmatmul.mubr.bf16.gmra.mrb[0].mxu0 %v166
    %v270 = vpop.f32.mrb[0].mxu0
    %v271 = vadd.f32 %v187, %v270
    %v272 = vpop.f32.mrb[0].mxu0
    %v273 = vpop.f32.mrb[0].mxu0
    %v274 = vpop.f32.mrb[0].mxu0
    %275 = vdwg.mxu0
    %v276 = vrot.slane %v271, 4
    %v277 = vadd.f32 %v271, %v276
    %v278 = vrot.slane %v277, 2
    %v279 = vadd.f32 %v277, %v278
    %v280 = vrot.slane %v279, 1
    %v281 = vadd.f32 %v279, %v280
    %v282 = vmul.f32 %v281, %v141
    %v283 = vsub.f32 %v271, %v282
    %v284 = vmul.f32 %v283, %v283
    %v285 = vrot.slane %v284, 4
    %v286 = vadd.f32 %v284, %v285
    %v287 = vrot.slane %v286, 2
    %v288 = vadd.f32 %v286, %v287
    %v289 = vrot.slane %v288, 1
    %v290 = vadd.f32 %v288, %v289
    %v291 = vmul.f32 %v290, %v141
    %v292 = vadd.f32 %v291, 1e-05
    %v293 = vrsqrt.pop %v292
    %v294 = vmul.f32 %v283, %v293
    %v295 = vlaneseq
    %v296 = vshrl.u32 %v295, 7
    %v297 = vsub.s32 4, %v296
    %v298 = vrot.slane %v52, %v297
    %v299 = vmul.f32 %v294, %v298
    %v300 = vlaneseq
    %v301 = vshrl.u32 %v300, 7
    %v302 = vsub.s32 5, %v301
    %v303 = vrot.slane %v52, %v302
    %v304 = vadd.f32 %v299, %v303
    %v305 = vmax.f32 %v304, 0.0
    %s306 = scalar_lea.vmem [#allocation4], 128
    %v307 = vld [vmem:[%s306] sm:$0xf]
    %v308 = vld [vmem:[%s306 + $0x4] sm:$0xf]
    %v309 = vld [vmem:[%s306 + $0x8] sm:$0xf]
    %v310 = vld [vmem:[%s306 + $0xc] sm:$0xf]
    %v311 = vld [vmem:[%s306 + $0x10] sm:$0xf]
    %v312 = vld [vmem:[%s306 + $0x14] sm:$0xf]
    %v313 = vld [vmem:[%s306 + $0x18] sm:$0xf]
    %v314 = vld [vmem:[%s306 + $0x1c] sm:$0xf]
    %v315 = vld [vmem:[%s306 + $0x20] sm:$0xf]
    %v316 = vld [vmem:[%s306 + $0x24] sm:$0xf]
    %v317 = vld [vmem:[%s306 + $0x28] sm:$0xf]
    %v318 = vld [vmem:[%s306 + $0x2c] sm:$0xf]
    %v319 = vld [vmem:[%s306 + $0x30] sm:$0xf]
    %v320 = vld [vmem:[%s306 + $0x34] sm:$0xf]
    %v321 = vld [vmem:[%s306 + $0x38] sm:$0xf]
    %v322 = vld [vmem:[%s306 + $0x3c] sm:$0xf]
    %v323 = vpack.c.bf16 %v305, %v305
    %v324 = vlaneseq
    %v325 = vshrl.u32 %v324, 7
    %v326 = vsub.s32 6, %v325
    %v327 = vrot.slane %v52, %v326
    %v344 = vunpack.c.l.b16 %v307
    %v345 = vunpack.c.l.b16 %v308
    %v346 = vunpack.c.l.b16 %v309
    %v347 = vunpack.c.l.b16 %v310
    %v348 = vunpack.c.l.b16 %v311
    %v349 = vunpack.c.l.b16 %v312
    %v350 = vunpack.c.l.b16 %v313
    %v351 = vunpack.c.l.b16 %v314
    %v352 = vunpack.c.l.b16 %v315
    %v353 = vunpack.c.l.b16 %v316
    %v354 = vunpack.c.l.b16 %v317
    %v355 = vunpack.c.l.b16 %v318
    %v356 = vunpack.c.l.b16 %v319
    %v357 = vunpack.c.l.b16 %v320
    %v358 = vunpack.c.l.b16 %v321
    %v359 = vunpack.c.l.b16 %v322
    %v360 = vpack.c.b16 %v345, %v344
    %v361 = vpack.c.b16 %v347, %v346
    %v362 = vpack.c.b16 %v349, %v348
    %v363 = vpack.c.b16 %v351, %v350
    %v364 = vpack.c.b16 %v353, %v352
    %v365 = vpack.c.b16 %v355, %v354
    %v366 = vpack.c.b16 %v357, %v356
    %v367 = vpack.c.b16 %v359, %v358
    %376 = vmatprep.subr.bf16.mxu0 0
    %377 = vmatpush1.bf16.msra.mxu0 %v360
    %378 = vmatprep.subr.bf16.mxu0 0
    %379 = vmatpush1.bf16.msra.mxu0 %v361
    %380 = vmatprep.subr.bf16.mxu0 0
    %381 = vmatpush1.bf16.msra.mxu0 %v362
    %382 = vmatprep.subr.bf16.mxu0 0
    %383 = vmatpush1.bf16.msra.mxu0 %v363
    %384 = vmatprep.subr.bf16.mxu0 0
    %385 = vmatpush1.bf16.msra.mxu0 %v364
    %386 = vmatprep.subr.bf16.mxu0 0
    %387 = vmatpush1.bf16.msra.mxu0 %v365
    %388 = vmatprep.subr.bf16.mxu0 0
    %389 = vmatpush1.bf16.msra.mxu0 %v366
    %390 = vmatprep.subr.bf16.mxu0 0
    %391 = vmatpush1.bf16.msra.mxu0 %v367
    %392 = vmatprep.subr.bf16.mxu0 0
    %393 = vmatpush1.bf16.msra.mxu0 0
    %394 = vmatprep.subr.bf16.mxu0 0
    %395 = vmatpush1.bf16.msra.mxu0 0
    %396 = vmatprep.subr.bf16.mxu0 0
    %397 = vmatpush1.bf16.msra.mxu0 0
    %398 = vmatprep.subr.bf16.mxu0 0
    %399 = vmatpush1.bf16.msra.mxu0 0
    %400 = vmatprep.subr.bf16.mxu0 0
    %401 = vmatpush1.bf16.msra.mxu0 0
    %402 = vmatprep.subr.bf16.mxu0 0
    %403 = vmatpush1.bf16.msra.mxu0 0
    %404 = vmatprep.subr.bf16.mxu0 0
    %405 = vmatpush1.bf16.msra.mxu0 0
    %406 = vmatprep.subr.bf16.mxu0 0
    %407 = vmatpush1.bf16.msra.mxu0 0
    %408 = vmatprep.mubr.bf16.mxu0 0
    %409 = vmatmul.mubr.bf16.gmra.mrb[0].mxu0 %v323
    %v410 = vpop.f32.mrb[0].mxu0
    %v411 = vadd.f32 %v327, %v410
    %v412 = vpop.f32.mrb[0].mxu0
    %v413 = vpop.f32.mrb[0].mxu0
    %v414 = vpop.f32.mrb[0].mxu0
    %415 = vdwg.mxu0
    %v416 = vsub.f32 0.0, %v411
    %v417 = vmul.f32 %v416, 1.442695
    %v418 = vpow.pop %v417
    %v419 = vadd.f32 %v418, 1.0
    %v420 = vrcp.pop %v419
    %421 = vst [vmem:[%s3] sm:$0xff] %v420
    // Predicated region
    $region26: #{domain_discriminator_forward.1} parent=1 // pred_check
      _
    $region27: #{domain_discriminator_forward.1} parent=1 // pred_check_branch
      %423 = sbr.rel (0) target = $region29
    $region28: #{domain_discriminator_forward.1} parent=1 // pred_region
      _
    $region29: #{domain_discriminator_forward.1} parent=1 // pred_fallthru
      _
    // Predicated region
    $region30: #{domain_discriminator_forward.1} parent=1 // pred_check
      _
    $region31: #{domain_discriminator_forward.1} parent=1 // pred_check_branch
      %425 = sbr.rel (0) target = $region33
    $region32: #{domain_discriminator_forward.1} parent=1 // pred_region
      _
    $region33: #{domain_discriminator_forward.1} parent=1 // pred_fallthru
      _
    %426 = vsyncpa [#allocation3], 1
    %427 = vsyncpa [#allocation5], 1

</llo_original>
